<compile_context>
chip_gen: v7x
topology: tpu7x:2x2x1
jax: 0.10.0
libtpu: 0.0.40
codegen_flags: <defaults>
</compile_context>

<pallas_src>
import math

import jax
import jax.numpy as jnp
from jax.experimental import pallas as pl
from jax.experimental.pallas import tpu as pltpu

_LANE = 128
# Per-buffer block budget (bytes). Live VMEM ~= 2*x_blk + 2*out_blk + 2*pe_blk
# ~= 6x this, which stays well under the 16 MiB scoped-VMEM default on v5e and
# the 32 MiB default on v6e/v7x, while each DMA is still ~1 MiB (near roofline).
_BLOCK_BYTES_CAP = 1 << 20


def _build_pe_table(d_model: int, max_len: int) -> jnp.ndarray:
    """Deterministic sinusoidal positional-encoding buffer (same as __init__)."""
    position = jnp.arange(0, max_len, dtype=jnp.float32)[:, None]          # (max_len, 1)
    div_term = jnp.exp(
        jnp.arange(0, d_model, 2, dtype=jnp.float32) * (-math.log(10000.0) / d_model)
    )                                                                       # (d_model/2,)
    angles = position * div_term                                            # (max_len, d_model/2)
    pe = jnp.zeros((max_len, d_model), dtype=jnp.float32)
    pe = pe.at[:, 0::2].set(jnp.sin(angles))
    pe = pe.at[:, 1::2].set(jnp.cos(angles))
    return pe


def _pe_add_kernel(x_ref, pe_ref, o_ref):
    # Batch dim is squeezed away by the BlockSpec -> plain 2-D (rows, lanes)
    # tiles; a single VPU add, no broadcast_in_dim in the body.
    o_ref[...] = x_ref[...] + pe_ref[...]
    # TODO(synk): dropout with p>0 would need pltpu.prng_seed/prng_random_bits;
    # p=0 here => identity, so nothing to do.


def _pick_tile(rows: int, row_bytes: int) -> int:
    """Largest multiple-of-8 divisor of `rows` whose block fits the VMEM budget."""
    cap = max(8, _BLOCK_BYTES_CAP // max(row_bytes, 1))
    best = None
    for d in range(8, min(rows, cap) + 1, 8):
        if rows % d == 0:
            best = d
    # Fall back to the full extent (always a legal block shape). For pathological
    # prime row counts this can exceed the budget; acceptable for this utility.
    return best if best is not None else rows


def _pe_add_tiled(x3: jnp.ndarray, pe2: jnp.ndarray) -> jnp.ndarray:
    """x3: (B, R, C); pe2: (R, C). Returns x3 + pe2[None, :, :]."""
    B, R, C = x3.shape
    tr = _pick_tile(R, C * x3.dtype.itemsize)
    grid = (B, R // tr)

    return pl.pallas_call(
        _pe_add_kernel,
        out_shape=jax.ShapeDtypeStruct((B, R, C), x3.dtype),
        grid_spec=pltpu.PrefetchScalarGridSpec(
            num_scalar_prefetch=0,
            grid=grid,
            in_specs=[
                # Squeezed batch dim: kernel sees a (tr, C) ref.
                pl.BlockSpec((pl.Squeezed(), tr, C), lambda b, s: (b, s, 0)),
                pl.BlockSpec((tr, C), lambda b, s: (s, 0)),
            ],
            out_specs=pl.BlockSpec((pl.Squeezed(), tr, C), lambda b, s: (b, s, 0)),
        ),
        compiler_params=pltpu.CompilerParams(
            # Both axes independent -> shardable across v7x's 2 TensorCores.
            dimension_semantics=("parallel", "parallel"),
        ),
    )(x3, pe2)


def positional_encoding2(x: jnp.ndarray, pe: jnp.ndarray) -> jnp.ndarray:
    """x: (B, S, D); pe: (max_len, D). Returns x + pe[:S, :] (dropout p=0)."""
    B, S, D = x.shape
    pe_slice = pe[:S, :].astype(x.dtype)  # static slice, matches self.pe[:x.size(1), :]

    if (S * D) % _LANE == 0:
        # Lane-dense path: flatten (S, D) into 128-wide rows so stores are
        # full-width even when D < 128. pe flattens identically, so the add is
        # position-wise correct: x[b, s, d] + pe[s, d].
        rows = (S * D) // _LANE
        x3 = x.reshape(B, rows, _LANE)
        pe2 = pe_slice.reshape(rows, _LANE)
        out = _pe_add_tiled(x3, pe2)
        return out.reshape(B, S, D)

    # Fallback: keep D as the (full-extent) lane dim and tile the sequence axis.
    return _pe_add_tiled(x, pe_slice)


if __name__ == "__main__":
    # Small shapes consistent with the module: (batch, seq, d_model).
    B, S, D = 2, 8, 32
    MAX_LEN = 512

    key = jax.random.PRNGKey(0)
    x = jax.random.normal(key, (B, S, D), dtype=jnp.float32)

    pe = _build_pe_table(D, MAX_LEN)

    out = positional_encoding2(x, pe)
    out = jax.block_until_ready(out)

    # Correctness check against plain-JAX reference of the PyTorch forward.
    ref = x + pe[:S, :][None, :, :]
    assert out.shape == (B, S, D)
    assert jnp.allclose(out, ref, atol=1e-6), "mismatch vs reference"

    print("KERNEL_OK")
</pallas_src>

<mosaic_0001>
module attributes {stable_mosaic.version = 11 : i64} {
  func.func @_pe_add_kernel(%arg0: i32, %arg1: i32, %arg2: memref<1x2x128xf32, #tpu.memory_space<vmem>>, %arg3: memref<2x128xf32, #tpu.memory_space<vmem>>, %arg4: memref<1x2x128xf32, #tpu.memory_space<vmem>>) attributes {dimension_semantics = [#tpu.dimension_semantics<parallel>, #tpu.dimension_semantics<parallel>], iteration_bounds = array<i64: 2, 1>, scalar_prefetch = 0 : i64, scratch_operands = 0 : i64, tpu.core_type = #tpu.core_type<tc>, window_params = [{transform_indices = @transform_0, window_bounds = array<i64: 1, 2, 128>}, {transform_indices = @transform_1, window_bounds = array<i64: 2, 128>}, {transform_indices = @transform_2, window_bounds = array<i64: 1, 2, 128>}]} {
    %c0 = arith.constant 0 : index
    %c0_0 = arith.constant 0 : index
    %c0_1 = arith.constant 0 : index
    %0 = vector.load %arg2[%c0, %c0_0, %c0_1] : memref<1x2x128xf32, #tpu.memory_space<vmem>>, vector<1x2x128xf32>
    %1 = vector.shape_cast %0 : vector<1x2x128xf32> to vector<2x128xf32>
    %c0_2 = arith.constant 0 : index
    %c0_3 = arith.constant 0 : index
    %2 = vector.load %arg3[%c0_2, %c0_3] : memref<2x128xf32, #tpu.memory_space<vmem>>, vector<2x128xf32>
    %3 = arith.addf %1, %2 : vector<2x128xf32>
    %c0_4 = arith.constant 0 : index
    %c0_5 = arith.constant 0 : index
    %c0_6 = arith.constant 0 : index
    %4 = vector.load %arg4[%c0_4, %c0_5, %c0_6] : memref<1x2x128xf32, #tpu.memory_space<vmem>>, vector<1x2x128xf32>
    %5 = vector.shape_cast %4 : vector<1x2x128xf32> to vector<2x128xf32>
    %6 = vector.shape_cast %3 : vector<2x128xf32> to vector<1x2x128xf32>
    tpu.vector_store %arg4[%c0_4, %c0_5, %c0_6], %6 {strides = array<i32>} : memref<1x2x128xf32, #tpu.memory_space<vmem>>, vector<1x2x128xf32>,
    return
  }
  func.func @transform_0(%arg0: i32, %arg1: i32) -> (i32, i32, i32) {
    %c0_i32 = arith.constant 0 : i32
    %c0_i32_0 = arith.constant 0 : i32
    return %arg0, %arg1, %c0_i32 : i32, i32, i32
  }
  func.func @transform_1(%arg0: i32, %arg1: i32) -> (i32, i32) {
    %c0_i32 = arith.constant 0 : i32
    %c0_i32_0 = arith.constant 0 : i32
    return %arg1, %c0_i32 : i32, i32
  }
  func.func @transform_2(%arg0: i32, %arg1: i32) -> (i32, i32, i32) {
    %c0_i32 = arith.constant 0 : i32
    %c0_i32_0 = arith.constant 0 : i32
    return %arg0, %arg1, %c0_i32 : i32, i32, i32
  }
}

</mosaic_0001>

<llo_original>
// kernel: tpu_custom_call.1
$region0: #{tpu_custom_call.1}
  #allocation0 [shape = 'u32[]', space=smem, size = 0x4, offset = 0x4, fixed_abs, tag = 'smem constant byte address 0x4 - core index']
  #allocation1 [shape = 'u32[144,128]{1,0:T(1,128)}', space=vmem, size = 0x12000, scoped, tag = 'internal scratch']
  %s0 = inlined_call_operand.hbm [shape: f32[2,2,128], index: 0, kind: input, shape index: {}]
  %s1 = inlined_call_operand.vmem [shape: f32[2,128], index: 1, kind: input, shape index: {}]
  %s2 = inlined_call_operand.hbm [shape: f32[2,2,128], index: 2, kind: output, shape index: {}]
  %s3 = sld [smem:[#allocation0]]
  $region45: #{tpu_custom_call.1} parent=0
    _
  %s5 = ssub.s32 1, %s3
  %s6 = scalar_select 0, %s5, %s3
  $region1: #{tpu_custom_call.1} parent=0
    #allocation2 [shape = 'u8[2048]{0}', space=vmem, size = 0x800, scoped, tag = 'input window, operand 0']
    #allocation3 [shape = 's32[2]{0}', space=sflag, size = 0x8, scoped, tag = 'scoped memory for tpu_custom_call.1']
    #allocation4 [shape = 's32[2]{0}', space=sflag, size = 0x8, scoped, tag = 'scoped memory for tpu_custom_call.1']
    #allocation5 [shape = 'u8[2048]{0}', space=vmem, size = 0x800, scoped, tag = 'output window, operand 0']
    %7 = vsyncpa [#allocation3], 0
    %s8 = scalar_lea.sflag [#allocation3], 1
    %9 = vsyncpa %s8, 0
    %10 = vsyncpa [#allocation4], 0
    %s11 = scalar_lea.sflag [#allocation4], 1
    %12 = vsyncpa %s11, 0
    loop: start=0, step=1, limit=4
    $region2: #{tpu_custom_call.1} parent=1 // loop_pre_header
      _
    $region3: #{tpu_custom_call.1} parent=1 // loop_header
      %s14 = sphi 0, %s18
      %p15 = scmp.ge.s32.totalorder %s14, 4
      %s21 = sphi 0, %s33
      %s22 = sphi 0, %s29
      %s23 = sphi 0, %s21
      %s24 = sphi 0, %s22
      %s25 = sphi 0, %s23
      %s26 = sphi 0, %s24
      %s38 = sphi 0, %s40
      %s41 = sphi 0, %s38
      %s42 = sphi 0, %s41
      %s58 = sphi 0, %s42
      %s64 = sphi 0, %s66
      %s67 = sphi 0, %s64
      %s68 = sphi 0, %s67
      %s84 = sphi 0, %s68
      %s92 = sphi 0, %s94
      %s95 = sphi 0, %s92
      %s96 = sphi 0, %s95
      %s112 = sphi 0, %s96
    $region4: #{tpu_custom_call.1} parent=1 // loop_header_branch
      %17 = sbr.rel (%p15) target = $region8
    $region5: #{tpu_custom_call.1} parent=1 // loop_body
      %s19 = ssub.s32 %s14, 1
      %s20 = ssub.s32 %s14, 2
      %s27 = sadd.s32 1, %s22
      %p28 = scmp.ge.s32.totalorder %s27, 1
      %s29 = scalar_select %p28, 0, %s27
      %s30 = sadd.s32 1, %s21
      %s31 = scalar_select %p28, %s30, %s21
      %p32 = scmp.ge.s32.totalorder %s31, 2
      %s33 = scalar_select %p32, 0, %s31
      %s34 = ssub.s32 %s21, %s33
      %s35 = ssub.s32 %s22, %s29
      %s36 = sor.u32 %s34, %s35
      %p37 = scmp.eq.s32.totalorder %s36, 0
      %s39 = sadd.s32 %s38, 1
      %s40 = scalar_select %p37, %s38, %s39
      %p43 = pneg %p37
      %p44 = scmp.eq.s32.totalorder %s14, 1
      %p45 = por %p43, %p44
      %p46 = scmp.ne.s32.totalorder %s38, %s41
      %p47 = scmp.eq.s32.totalorder %s14, 0
      %p48 = por %p46, %p47
      %p49 = scmp.ne.s32.totalorder %s38, %s41
      %p50 = scmp.eq.s32.totalorder %s19, 1
      %p51 = por %p49, %p50
      %p52 = scmp.ne.s32.totalorder %s41, %s42
      %p53 = scmp.eq.s32.totalorder %s19, 0
      %p54 = por %p52, %p53
      %p55 = scmp.ne.s32.totalorder %s41, %s42
      %p56 = scmp.eq.s32.totalorder %s20, 1
      %p57 = por %p55, %p56
      %p59 = scmp.ne.s32.totalorder %s42, %s58
      %p60 = scmp.eq.s32.totalorder %s20, 0
      %p61 = por %p59, %p60
      %s62 = ssub.s32 %s22, %s29
      %p63 = scmp.eq.s32.totalorder %s62, 0
      %s65 = sadd.s32 %s64, 1
      %s66 = scalar_select %p63, %s64, %s65
      %p69 = pneg %p63
      %p70 = scmp.eq.s32.totalorder %s14, 1
      %p71 = por %p69, %p70
      %p72 = scmp.ne.s32.totalorder %s64, %s67
      %p73 = scmp.eq.s32.totalorder %s14, 0
      %p74 = por %p72, %p73
      %p75 = scmp.ne.s32.totalorder %s64, %s67
      %p76 = scmp.eq.s32.totalorder %s19, 1
      %p77 = por %p75, %p76
      %p78 = scmp.ne.s32.totalorder %s67, %s68
      %p79 = scmp.eq.s32.totalorder %s19, 0
      %p80 = por %p78, %p79
      %p81 = scmp.ne.s32.totalorder %s67, %s68
      %p82 = scmp.eq.s32.totalorder %s20, 1
      %p83 = por %p81, %p82
      %p85 = scmp.ne.s32.totalorder %s68, %s84
      %p86 = scmp.eq.s32.totalorder %s20, 0
      %p87 = por %p85, %p86
      %s88 = ssub.s32 %s21, %s33
      %s89 = ssub.s32 %s22, %s29
      %s90 = sor.u32 %s88, %s89
      %p91 = scmp.eq.s32.totalorder %s90, 0
      %s93 = sadd.s32 %s92, 1
      %s94 = scalar_select %p91, %s92, %s93
      %p97 = pneg %p91
      %p98 = scmp.eq.s32.totalorder %s14, 1
      %p99 = por %p97, %p98
      %p100 = scmp.ne.s32.totalorder %s92, %s95
      %p101 = scmp.eq.s32.totalorder %s14, 0
      %p102 = por %p100, %p101
      %p103 = scmp.ne.s32.totalorder %s92, %s95
      %p104 = scmp.eq.s32.totalorder %s19, 1
      %p105 = por %p103, %p104
      %p106 = scmp.ne.s32.totalorder %s95, %s96
      %p107 = scmp.eq.s32.totalorder %s19, 0
      %p108 = por %p106, %p107
      %p109 = scmp.ne.s32.totalorder %s95, %s96
      %p110 = scmp.eq.s32.totalorder %s20, 1
      %p111 = por %p109, %p110
      %p113 = scmp.ne.s32.totalorder %s96, %s112
      %p114 = scmp.eq.s32.totalorder %s20, 0
      %p115 = por %p113, %p114
      %p116 = scmp.le.s32.totalorder 1, %s14
      %p117 = scmp.lt.s32.totalorder %s14, 3
      %p118 = pnand %p116, %p117
      %p119 = pneg %p118
      // Predicated region
      $region9: #{tpu_custom_call.1} parent=5 // pred_check
        _
      $region10: #{tpu_custom_call.1} parent=5 // pred_check_branch
        %121 = sbr.rel (%p118) target = $region12
      $region11: #{tpu_custom_call.1} parent=5 // pred_region
        %s122 = ssub.s32 %s14, 1
        // Predicated region
        $region13: #{tpu_custom_call.1} parent=11 // pred_check
          %p123 = pneg %p80
        $region14: #{tpu_custom_call.1} parent=11 // pred_check_branch
          %125 = sbr.rel (%p123) target = $region16
        $region15: #{tpu_custom_call.1} parent=11 // pred_region
          %p126 = scmp.lt.s32.totalorder %s24, 0
          %s127 = scalar_select %p126, %s24, 0
          %s128 = smul.addr %s127, 2
          %s129 = scalar_lea.vmem %s1, %s128
        $region16: #{tpu_custom_call.1} parent=11 // pred_fallthru
          _
      $region12: #{tpu_custom_call.1} parent=5 // pred_fallthru
        _
      %p130 = scmp.lt.s32.totalorder %s14, 2
      // Predicated region
      $region17: #{tpu_custom_call.1} parent=5 // pred_check
        %p131 = pneg %p130
      $region18: #{tpu_custom_call.1} parent=5 // pred_check_branch
        %133 = sbr.rel (%p131) target = $region20
      $region19: #{tpu_custom_call.1} parent=5 // pred_region
        // Predicated region
        $region21: #{tpu_custom_call.1} parent=19 // pred_check
          %p134 = pneg %p48
        $region22: #{tpu_custom_call.1} parent=19 // pred_check_branch
          %136 = sbr.rel (%p134) target = $region24
        $region23: #{tpu_custom_call.1} parent=19 // pred_region
          %s137 = sand.u32 %s38, 1
          %s138 = scalar_lea.sflag [#allocation3], %s137
          %s139 = sand.u32 %s38, 1
          %s140 = smul.addr %s139, 2
          %s141 = scalar_lea.vmem [#allocation2], %s140
          %s143 = ssub.s32 32, 32
          %144 = vsyncadd %s138, %s143
          %s145 = sadd.s32 %s22, %s21
          %s146 = smul.addr %s145, 32
          %s147 = scalar_lea.hbm %s0, %s146
          %s149 = sshll.u32 %s141, 4
          %s150 = int_to_ptr.vmem [resolvable:$true] %s149
          %152 = dma.hbm_to_vmem [thread:$0]  %s147, 32, %s150, %s138
        $region24: #{tpu_custom_call.1} parent=19 // pred_fallthru
          _
      $region20: #{tpu_custom_call.1} parent=5 // pred_fallthru
        _
      %p153 = scmp.le.s32.totalorder 1, %s14
      %p154 = scmp.lt.s32.totalorder %s14, 3
      %p155 = pnand %p153, %p154
      %p156 = pneg %p155
      // Predicated region
      $region25: #{tpu_custom_call.1} parent=5 // pred_check
        _
      $region26: #{tpu_custom_call.1} parent=5 // pred_check_branch
        %158 = sbr.rel (%p155) target = $region28
      $region27: #{tpu_custom_call.1} parent=5 // pred_region
        %s159 = ssub.s32 %s14, 1
        %s160 = sand.u32 %s41, 1
        %s161 = scalar_lea.sflag [#allocation3], %s160
        %s162 = sand.u32 %s41, 1
        %s163 = smul.addr %s162, 2
        %s164 = scalar_lea.vmem [#allocation2], %s163
        // Predicated region
        $region29: #{tpu_custom_call.1} parent=27 // pred_check
          %p165 = pneg %p54
        $region30: #{tpu_custom_call.1} parent=27 // pred_check_branch
          %167 = sbr.rel (%p165) target = $region32
        $region31: #{tpu_custom_call.1} parent=27 // pred_region
          %168 = dma.done %s161, 32
        $region32: #{tpu_custom_call.1} parent=27 // pred_fallthru
          _
        %s169 = sand.u32 %s41, 1
        %s170 = scalar_lea.sflag [#allocation3], %s169
        %s171 = sand.u32 %s41, 1
        %s172 = smul.addr %s171, 2
        %s173 = scalar_lea.vmem [#allocation2], %s172
        %p174 = pneg %p54
        %p175 = pneg %p51
        %p176 = scmp.lt.s32.totalorder %s24, 0
        %s177 = scalar_select %p176, %s24, 0
        %s178 = smul.addr %s177, 2
        %s179 = scalar_lea.vmem %s1, %s178
        %p180 = pneg %p80
        %p181 = pneg %p77
        %p182 = pneg %p108
        %p183 = pneg %p105
        %s184 = sand.u32 %s95, 1
        %s185 = scalar_lea.sflag [#allocation4], %s184
        %s186 = sand.u32 %s95, 1
        %s187 = smul.addr %s186, 2
        %s188 = scalar_lea.vmem [#allocation5], %s187
        %p189 = scmp.lt.s32.totalorder %s24, 0
        %s190 = scalar_select %p189, %s24, 0
        %s191 = smul.addr %s190, 2
        %s192 = scalar_lea.vmem %s1, %s191
        %v193 = vld [vmem:[%s164] sm:$0x3]
        %v194 = vld [vmem:[%s192] sm:$0x3]
        %v195 = vadd.f32 %v193, %v194
        %196 = vst [vmem:[%s188] sm:$0x3] %v195
        %s197 = sand.u32 %s95, 1
        %s198 = scalar_lea.sflag [#allocation4], %s197
        %s199 = sand.u32 %s95, 1
        %s200 = smul.addr %s199, 2
        %s201 = scalar_lea.vmem [#allocation5], %s200
        // Predicated region
        $region33: #{tpu_custom_call.1} parent=27 // pred_check
          %p202 = pneg %p105
        $region34: #{tpu_custom_call.1} parent=27 // pred_check_branch
          %204 = sbr.rel (%p202) target = $region36
        $region35: #{tpu_custom_call.1} parent=27 // pred_region
          %s206 = ssub.s32 32, 32
          %207 = vsyncadd %s198, %s206
          %s208 = sadd.s32 %s24, %s23
          %s209 = smul.addr %s208, 32
          %s210 = scalar_lea.hbm %s2, %s209
          %s212 = sshll.u32 %s201, 4
          %s213 = int_to_ptr.vmem [resolvable:$true] %s212
          %215 = dma.vmem_to_hbm [thread:$0]  %s213, 32, %s210, %s198
        $region36: #{tpu_custom_call.1} parent=27 // pred_fallthru
          _
      $region28: #{tpu_custom_call.1} parent=5 // pred_fallthru
        _
      %p216 = scmp.le.s32.totalorder 2, %s14
      // Predicated region
      $region37: #{tpu_custom_call.1} parent=5 // pred_check
        %p217 = pneg %p216
      $region38: #{tpu_custom_call.1} parent=5 // pred_check_branch
        %219 = sbr.rel (%p217) target = $region40
      $region39: #{tpu_custom_call.1} parent=5 // pred_region
        %s220 = ssub.s32 %s14, 2
        // Predicated region
        $region41: #{tpu_custom_call.1} parent=39 // pred_check
          %p221 = pneg %p111
        $region42: #{tpu_custom_call.1} parent=39 // pred_check_branch
          %223 = sbr.rel (%p221) target = $region44
        $region43: #{tpu_custom_call.1} parent=39 // pred_region
          %s224 = sand.u32 %s96, 1
          %s225 = scalar_lea.sflag [#allocation4], %s224
          %s226 = sand.u32 %s96, 1
          %s227 = smul.addr %s226, 2
          %s228 = scalar_lea.vmem [#allocation5], %s227
          %229 = dma.done %s225, 32
        $region44: #{tpu_custom_call.1} parent=39 // pred_fallthru
          _
      $region40: #{tpu_custom_call.1} parent=5 // pred_fallthru
        _
    $region6: #{tpu_custom_call.1} parent=1 // loop_footer
      %s18 = sadd.s32 1, %s14
    $region7: #{tpu_custom_call.1} parent=1 // loop_footer_branch
      %13 = sbr.rel target = $region3
    $region8: #{tpu_custom_call.1} parent=1 // loop_exit
      _
    %230 = vsyncpa [#allocation3], 1
    %s231 = scalar_lea.sflag [#allocation3], 1
    %232 = vsyncpa %s231, 1
    %233 = vsyncpa [#allocation4], 1
    %s234 = scalar_lea.sflag [#allocation4], 1
    %235 = vsyncpa %s234, 1

</llo_original>
